<compile_context>
chip_gen: v7x
topology: tpu7x:2x2x1
jax: 0.10.0
libtpu: 0.0.40
codegen_flags: <defaults>
</compile_context>

<pallas_src>
import itertools
from functools import partial

import jax
import jax.numpy as jnp
import numpy as np
from jax.experimental import pallas as pl
from jax.experimental.pallas import tpu as pltpu

_LANE = 128
_MAX_TILE = 8192  # lanes per grid step; (40, 8192) f32 block ~= 1.3 MB


def _round_up(x, m):
    return (x + m - 1) // m * m


def _choose_tile(c_total):
    """Pick a lane tile: big (few grid steps) but >= 2 tiles when possible (v7x)."""
    c_lane = _round_up(max(c_total, 1), _LANE)
    if c_lane <= _LANE:
        tile = _LANE                                # can't split below one lane group
    else:
        half = _round_up((c_lane + 1) // 2, _LANE)  # ~2 balanced tiles for 2 TCs
        tile = min(half, _MAX_TILE)
    c_pad = _round_up(c_lane, tile)
    return tile, c_pad


def _anchor_kernel(tab_ref, cyxs_ref, out_ref):
    """out[s, c] = sel_y[s]*cy[c] + sel_x[s]*cx[c] + unit_off[s]*stride[c].

    tab_ref  : (R_pad, 8) f32 tiny resident table; col0=y-sel, col1=x-sel,
               col2=per-anchor unit half-size (to be scaled by stride).
    cyxs_ref : (3, TILE) f32; row0=cy, row1=cx, row2=stride per grid cell.
    out_ref  : (R_pad, TILE) f32 lane-dense output tile (R_pad multiple of 8).
    """
    cy = cyxs_ref[0:1, :]          # (1, TILE)
    cx = cyxs_ref[1:2, :]          # (1, TILE)
    st = cyxs_ref[2:3, :]          # (1, TILE)
    sel_y = tab_ref[:, 0:1]        # (R_pad, 1)
    sel_x = tab_ref[:, 1:2]        # (R_pad, 1)
    uoff = tab_ref[:, 2:3]         # (R_pad, 1)
    out_ref[...] = sel_y * cy + sel_x * cx + uoff * st


@partial(jax.jit, static_argnames=("c_total", "tile", "r"))
def _generate_anchors(tab, cyxs, *, c_total, tile, r):
    """One fused pallas_call over all pyramid levels + fused layout plumbing."""
    r_pad = tab.shape[0]
    c_pad = cyxs.shape[1]
    num_tiles = c_pad // tile
    out = pl.pallas_call(
        _anchor_kernel,
        out_shape=jax.ShapeDtypeStruct((r_pad, c_pad), jnp.float32),
        grid=(num_tiles,),
        in_specs=[
            pl.BlockSpec((r_pad, 8), lambda i: (0, 0)),   # tiny resident coeff table
            pl.BlockSpec((3, tile), lambda i: (0, i)),    # per-cell (cy, cx, stride)
        ],
        out_specs=pl.BlockSpec((r_pad, tile), lambda i: (0, i)),
        compiler_params=pltpu.CompilerParams(dimension_semantics=("parallel",)),
    )(tab, cyxs)
    # Layout plumbing (fused into this jit): (R_pad, C_pad) -> (C, R) -> [1, C*A, 4].
    return out[:r, :c_total].T.reshape(-1, 4)[None, :, :]


class AnchorsPallas:
    """JAX/Pallas port of the PyTorch Anchors module (forward pass)."""

    def __init__(self, anchor_scale=4.0, pyramid_levels=None, **kwargs):
        self.anchor_scale = anchor_scale
        self.pyramid_levels = [3, 4, 5, 6, 7] if pyramid_levels is None else pyramid_levels
        self.strides = kwargs.get("strides", [2 ** x for x in self.pyramid_levels])
        self.scales = np.array(
            kwargs.get("scales", [2 ** 0, 2 ** (1.0 / 3.0), 2 ** (2.0 / 3.0)])
        )
        self.ratios = kwargs.get("ratios", [(1.0, 1.0), (1.4, 0.7), (0.7, 1.4)])
        # Anchors depend only on static shapes + constants, so cache per spatial
        # shape (mirrors the PyTorch module's cache).
        # TODO(synk): the PyTorch module additionally keys its cache on the torch
        # device and supports a float16 output dtype; neither is reproduced here.
        self._cache = {}
        self._tab, self._r = self._coeff_table()

    def _coeff_table(self):
        """(R_pad, 8) per-anchor coefficient table (level independent)."""
        num_anchors = len(self.scales) * len(self.ratios)
        r = 4 * num_anchors                      # rows = anchors x (y1,x1,y2,x2)
        r_pad = _round_up(max(r, 8), 8)          # sublane-aligned output rows
        tab = np.zeros((r_pad, 8), dtype=np.float32)
        for a, (scale, ratio) in enumerate(itertools.product(self.scales, self.ratios)):
            u_x = self.anchor_scale * scale * ratio[0] / 2.0
            u_y = self.anchor_scale * scale * ratio[1] / 2.0
            # rows: [y1, x1, y2, x2] = [cy - s*u_y, cx - s*u_x, cy + s*u_y, cx + s*u_x]
            tab[4 * a + 0, 0] = 1.0
            tab[4 * a + 0, 2] = -u_y
            tab[4 * a + 1, 1] = 1.0
            tab[4 * a + 1, 2] = -u_x
            tab[4 * a + 2, 0] = 1.0
            tab[4 * a + 2, 2] = +u_y
            tab[4 * a + 3, 1] = 1.0
            tab[4 * a + 3, 2] = +u_x
        return tab, r

    def _cell_table(self, h, w):
        """Per-cell (cy, cx, stride) for all levels, padded to a lane-aligned width."""
        cy, cx, st = [], [], []
        for stride in self.strides:
            if w % stride != 0:
                raise ValueError("input size must be divided by the stride.")
            # TODO(synk): like the reference, h divisibility is not checked.
            x = np.arange(stride / 2.0, w, stride)
            y = np.arange(stride / 2.0, h, stride)
            xv, yv = np.meshgrid(x, y)            # y-outer / x-inner, matches reference
            cy.append(yv.reshape(-1))
            cx.append(xv.reshape(-1))
            st.append(np.full(xv.size, float(stride)))
        cy = np.concatenate(cy)
        cx = np.concatenate(cx)
        st = np.concatenate(st)
        c_total = int(cy.size)
        tile, c_pad = _choose_tile(c_total)
        cyxs = np.zeros((3, c_pad), dtype=np.float32)   # rows: cy, cx, stride
        cyxs[0, :c_total] = cy
        cyxs[1, :c_total] = cx
        cyxs[2, :c_total] = st
        return cyxs, c_total, tile

    def __call__(self, image):
        h, w = int(image.shape[2]), int(image.shape[3])
        key = (h, w)
        if key in self._cache:
            return self._cache[key]
        cyxs, c_total, tile = self._cell_table(h, w)
        anchors = _generate_anchors(jnp.asarray(self._tab), jnp.asarray(cyxs),
                                    c_total=c_total, tile=tile, r=self._r)
        self._cache[key] = anchors
        return anchors  # [1, N, 4] float32


def _numpy_reference(image_shape, anchor_scale, strides, scales, ratios):
    """Direct transcription of the PyTorch forward (numpy) for verification."""
    boxes_all = []
    for stride in strides:
        boxes_level = []
        for scale, ratio in itertools.product(scales, ratios):
            base_anchor_size = anchor_scale * stride * scale
            anchor_size_x_2 = base_anchor_size * ratio[0] / 2.0
            anchor_size_y_2 = base_anchor_size * ratio[1] / 2.0
            x = np.arange(stride / 2, image_shape[1], stride)
            y = np.arange(stride / 2, image_shape[0], stride)
            xv, yv = np.meshgrid(x, y)
            xv = xv.reshape(-1)
            yv = yv.reshape(-1)
            boxes = np.vstack((yv - anchor_size_y_2, xv - anchor_size_x_2,
                               yv + anchor_size_y_2, xv + anchor_size_x_2))
            boxes = np.swapaxes(boxes, 0, 1)
            boxes_level.append(np.expand_dims(boxes, axis=1))
        boxes_level = np.concatenate(boxes_level, axis=1)
        boxes_all.append(boxes_level.reshape([-1, 4]))
    return np.vstack(boxes_all).astype(np.float32)[None]


if __name__ == "__main__":
    key = jax.random.PRNGKey(0)
    # Small NCHW image; only its spatial shape matters for anchor generation.
    x = jax.random.normal(key, (2, 4, 16, 16), dtype=jnp.float32)

    # Small pyramid levels so the 16x16 image is divisible by every stride.
    anchors = AnchorsPallas(anchor_scale=4.0, pyramid_levels=[2, 3, 4])
    out = anchors(x)
    out = jax.block_until_ready(out)

    ref = _numpy_reference((16, 16), anchors.anchor_scale, anchors.strides,
                           anchors.scales, anchors.ratios)
    assert out.shape == ref.shape, (out.shape, ref.shape)
    np.testing.assert_allclose(np.asarray(out), ref, rtol=1e-5, atol=1e-5)

    # Exercise the per-shape cache path (mirrors the PyTorch module behavior).
    out2 = jax.block_until_ready(anchors(x))
    np.testing.assert_allclose(np.asarray(out2), ref, rtol=1e-5, atol=1e-5)

    print("KERNEL_OK")
</pallas_src>

<mosaic_0001>
module attributes {stable_mosaic.version = 11 : i64} {
  func.func @_anchor_kernel(%arg0: i32, %arg1: memref<40x8xf32, #tpu.memory_space<vmem>>, %arg2: memref<3x128xf32, #tpu.memory_space<vmem>>, %arg3: memref<40x128xf32, #tpu.memory_space<vmem>>) attributes {dimension_semantics = [#tpu.dimension_semantics<parallel>], iteration_bounds = array<i64: 1>, scalar_prefetch = 0 : i64, scratch_operands = 0 : i64, tpu.core_type = #tpu.core_type<tc>, window_params = [{pipeline_mode = #tpu.pipeline_mode<synchronous>, transform_indices = @transform_0, window_bounds = array<i64: 40, 8>}, {transform_indices = @transform_1, window_bounds = array<i64: 3, 128>}, {transform_indices = @transform_2, window_bounds = array<i64: 40, 128>}]} {
    %c0 = arith.constant 0 : index
    %c0_0 = arith.constant 0 : index
    %0 = vector.load %arg2[%c0, %c0_0] : memref<3x128xf32, #tpu.memory_space<vmem>>, vector<1x128xf32>
    %c1 = arith.constant 1 : index
    %c0_1 = arith.constant 0 : index
    %1 = vector.load %arg2[%c1, %c0_1] : memref<3x128xf32, #tpu.memory_space<vmem>>, vector<1x128xf32>
    %c2 = arith.constant 2 : index
    %c0_2 = arith.constant 0 : index
    %2 = vector.load %arg2[%c2, %c0_2] : memref<3x128xf32, #tpu.memory_space<vmem>>, vector<1x128xf32>
    %c0_3 = arith.constant 0 : index
    %c0_4 = arith.constant 0 : index
    %3 = vector.load %arg1[%c0_3, %c0_4] : memref<40x8xf32, #tpu.memory_space<vmem>>, vector<40x1xf32>
    %c0_5 = arith.constant 0 : index
    %c1_6 = arith.constant 1 : index
    %4 = vector.load %arg1[%c0_5, %c1_6] : memref<40x8xf32, #tpu.memory_space<vmem>>, vector<40x1xf32>
    %c0_7 = arith.constant 0 : index
    %c2_8 = arith.constant 2 : index
    %5 = vector.load %arg1[%c0_7, %c2_8] : memref<40x8xf32, #tpu.memory_space<vmem>>, vector<40x1xf32>
    %6 = vector.broadcast %3 : vector<40x1xf32> to vector<40x128xf32>
    %7 = vector.broadcast %0 : vector<1x128xf32> to vector<40x128xf32>
    %8 = arith.mulf %6, %7 : vector<40x128xf32>
    %9 = vector.broadcast %4 : vector<40x1xf32> to vector<40x128xf32>
    %10 = vector.broadcast %1 : vector<1x128xf32> to vector<40x128xf32>
    %11 = arith.mulf %9, %10 : vector<40x128xf32>
    %12 = arith.addf %8, %11 : vector<40x128xf32>
    %13 = vector.broadcast %5 : vector<40x1xf32> to vector<40x128xf32>
    %14 = vector.broadcast %2 : vector<1x128xf32> to vector<40x128xf32>
    %15 = arith.mulf %13, %14 : vector<40x128xf32>
    %16 = arith.addf %12, %15 : vector<40x128xf32>
    %c0_9 = arith.constant 0 : index
    %c0_10 = arith.constant 0 : index
    %17 = vector.load %arg3[%c0_9, %c0_10] : memref<40x128xf32, #tpu.memory_space<vmem>>, vector<40x128xf32>
    tpu.vector_store %arg3[%c0_9, %c0_10], %16 {strides = array<i32>} : memref<40x128xf32, #tpu.memory_space<vmem>>, vector<40x128xf32>,
    return
  }
  func.func @transform_0(%arg0: i32) -> (i32, i32) {
    %c0_i32 = arith.constant 0 : i32
    %c0_i32_0 = arith.constant 0 : i32
    %c0_i32_1 = arith.constant 0 : i32
    return %c0_i32, %c0_i32_0 : i32, i32
  }
  func.func @transform_1(%arg0: i32) -> (i32, i32) {
    %c0_i32 = arith.constant 0 : i32
    %c0_i32_0 = arith.constant 0 : i32
    return %c0_i32, %arg0 : i32, i32
  }
  func.func @transform_2(%arg0: i32) -> (i32, i32) {
    %c0_i32 = arith.constant 0 : i32
    %c0_i32_0 = arith.constant 0 : i32
    return %c0_i32, %arg0 : i32, i32
  }
}

</mosaic_0001>

<llo_original>
// kernel: _generate_anchors.1
$region0: #{_generate_anchors.1}
  #allocation0 [shape = 'u32[]', space=smem, size = 0x4, offset = 0x4, fixed_abs, tag = 'smem constant byte address 0x4 - core index']
  #allocation1 [shape = 'u32[144,128]{1,0:T(1,128)}', space=vmem, size = 0x12000, scoped, tag = 'internal scratch']
  %s0 = inlined_call_operand.vmem [shape: f32[40,8], index: 0, kind: input, shape index: {}]
  %s1 = inlined_call_operand.vmem [shape: f32[3,128], index: 1, kind: input, shape index: {}]
  %s2 = inlined_call_operand.vmem [shape: f32[40,128], index: 2, kind: output, shape index: {}]
  %s3 = sld [smem:[#allocation0]]
  $region18: #{_generate_anchors.1} parent=0
    _
  %s5 = ssub.s32 1, %s3
  %s6 = scalar_select 0, %s5, %s3
  // Predicated region
  $region2: #{_generate_anchors.1} parent=0 // pred_check
    _
  $region3: #{_generate_anchors.1} parent=0 // pred_check_branch
    %8 = sbr.rel (0) target = $region5
  $region4: #{_generate_anchors.1} parent=0 // pred_region
    _
  $region5: #{_generate_anchors.1} parent=0 // pred_fallthru
    _
  // Predicated region
  $region6: #{_generate_anchors.1} parent=0 // pred_check
    _
  $region7: #{_generate_anchors.1} parent=0 // pred_check_branch
    %10 = sbr.rel (0) target = $region9
  $region8: #{_generate_anchors.1} parent=0 // pred_region
    _
  $region9: #{_generate_anchors.1} parent=0 // pred_fallthru
    _
  %v11 = vld [vmem:[%s1] sm:$0x1]
  %v12 = vld [vmem:[%s1 + $0x1] sm:$0x1]
  %v13 = vld [vmem:[%s1 + $0x2] sm:$0x1]
  %v14 = vld [vmem:[%s0] sm:$0xff]
  %v15 = vld [vmem:[%s0 + $0x8] sm:$0xff]
  %v16 = vld [vmem:[%s0 + $0x10] sm:$0xff]
  %v17 = vld [vmem:[%s0 + $0x18] sm:$0xff]
  %v18 = vld [vmem:[%s0 + $0x20] sm:$0xff]
  %20 = vset.pattern.permute.xlu0 0
  %21 = vperm.xlu0 %20, %v14
  %v22 = vpop.permute.xlu0 %21
  %25 = vset.pattern.permute.xlu0 0
  %26 = vperm.xlu0 %25, %v15
  %v27 = vpop.permute.xlu0 %26
  %30 = vset.pattern.permute.xlu0 0
  %31 = vperm.xlu0 %30, %v16
  %v32 = vpop.permute.xlu0 %31
  %35 = vset.pattern.permute.xlu0 0
  %36 = vperm.xlu0 %35, %v17
  %v37 = vpop.permute.xlu0 %36
  %40 = vset.pattern.permute.xlu0 0
  %41 = vperm.xlu0 %40, %v18
  %v42 = vpop.permute.xlu0 %41
  %v44 = vlaneseq
  %v45 = vshrl.u32 %v44, 7
  %v46 = vsub.s32 0, %v45
  %v47 = vrot.slane %v11, %v46
  %v48 = vmul.f32 %v22, %v47
  %v49 = vmul.f32 %v27, %v47
  %v50 = vmul.f32 %v32, %v47
  %v51 = vmul.f32 %v37, %v47
  %v52 = vmul.f32 %v42, %v47
  %53 = vset.pattern.permute.xlu0 1
  %54 = vperm.xlu0 %53, %v14
  %v55 = vpop.permute.xlu0 %54
  %57 = vset.pattern.permute.xlu0 1
  %58 = vperm.xlu0 %57, %v15
  %v59 = vpop.permute.xlu0 %58
  %61 = vset.pattern.permute.xlu0 1
  %62 = vperm.xlu0 %61, %v16
  %v63 = vpop.permute.xlu0 %62
  %65 = vset.pattern.permute.xlu0 1
  %66 = vperm.xlu0 %65, %v17
  %v67 = vpop.permute.xlu0 %66
  %69 = vset.pattern.permute.xlu0 1
  %70 = vperm.xlu0 %69, %v18
  %v71 = vpop.permute.xlu0 %70
  %v73 = vlaneseq
  %v74 = vshrl.u32 %v73, 7
  %v75 = vsub.s32 0, %v74
  %v76 = vrot.slane %v12, %v75
  %v77 = vmul.f32 %v55, %v76
  %v78 = vmul.f32 %v59, %v76
  %v79 = vmul.f32 %v63, %v76
  %v80 = vmul.f32 %v67, %v76
  %v81 = vmul.f32 %v71, %v76
  %v82 = vadd.f32 %v48, %v77
  %v83 = vadd.f32 %v49, %v78
  %v84 = vadd.f32 %v50, %v79
  %v85 = vadd.f32 %v51, %v80
  %v86 = vadd.f32 %v52, %v81
  %87 = vset.pattern.permute.xlu0 2
  %88 = vperm.xlu0 %87, %v14
  %v89 = vpop.permute.xlu0 %88
  %91 = vset.pattern.permute.xlu0 2
  %92 = vperm.xlu0 %91, %v15
  %v93 = vpop.permute.xlu0 %92
  %95 = vset.pattern.permute.xlu0 2
  %96 = vperm.xlu0 %95, %v16
  %v97 = vpop.permute.xlu0 %96
  %99 = vset.pattern.permute.xlu0 2
  %100 = vperm.xlu0 %99, %v17
  %v101 = vpop.permute.xlu0 %100
  %103 = vset.pattern.permute.xlu0 2
  %104 = vperm.xlu0 %103, %v18
  %v105 = vpop.permute.xlu0 %104
  %v107 = vlaneseq
  %v108 = vshrl.u32 %v107, 7
  %v109 = vsub.s32 0, %v108
  %v110 = vrot.slane %v13, %v109
  %v111 = vmul.f32 %v89, %v110
  %v112 = vmul.f32 %v93, %v110
  %v113 = vmul.f32 %v97, %v110
  %v114 = vmul.f32 %v101, %v110
  %v115 = vmul.f32 %v105, %v110
  %v116 = vadd.f32 %v82, %v111
  %v117 = vadd.f32 %v83, %v112
  %v118 = vadd.f32 %v84, %v113
  %v119 = vadd.f32 %v85, %v114
  %v120 = vadd.f32 %v86, %v115
  %121 = vst [vmem:[%s2] sm:$0xff] %v116
  %122 = vst [vmem:[%s2 + $0x8] sm:$0xff] %v117
  %123 = vst [vmem:[%s2 + $0x10] sm:$0xff] %v118
  %124 = vst [vmem:[%s2 + $0x18] sm:$0xff] %v119
  %125 = vst [vmem:[%s2 + $0x20] sm:$0xff] %v120
  // Predicated region
  $region10: #{_generate_anchors.1} parent=0 // pred_check
    _
  $region11: #{_generate_anchors.1} parent=0 // pred_check_branch
    %127 = sbr.rel (0) target = $region13
  $region12: #{_generate_anchors.1} parent=0 // pred_region
    _
  $region13: #{_generate_anchors.1} parent=0 // pred_fallthru
    _
  // Predicated region
  $region14: #{_generate_anchors.1} parent=0 // pred_check
    _
  $region15: #{_generate_anchors.1} parent=0 // pred_check_branch
    %129 = sbr.rel (0) target = $region17
  $region16: #{_generate_anchors.1} parent=0 // pred_region
    _
  $region17: #{_generate_anchors.1} parent=0 // pred_fallthru
    _

</llo_original>
